<compile_context>
chip_gen: v7x
topology: tpu7x:2x2x1
jax: 0.10.0
libtpu: 0.0.40
codegen_flags: <defaults>
</compile_context>

<pallas_src>
import functools

import jax
import jax.numpy as jnp
from jax.experimental import pallas as pl
from jax.experimental.pallas import tpu as pltpu


def _round_up(a, m):
    return (a + m - 1) // m * m


def _gsp_kernel(x_ref, wm_ref, ws_ref, b_ref, o_ref, sum_ref, sq_ref, *,
                inv_l, inv_lm1):
    # x_ref:   (tb, tl, Dp)  input block (batch tile, time tile, padded channels)
    # wm_ref:  (Dp, Dp)      gate weight acting on the mean  (grid-invariant)
    # ws_ref:  (Dp, Dp)      gate weight acting on the std   (grid-invariant)
    # b_ref:   (1, Dp)       gate bias                       (grid-invariant)
    # o_ref:   (tb, Dp)      pooled output block (resident across the L axis)
    # sum_ref: (tb, Dp) f32  running sum accumulator
    # sq_ref:  (tb, Dp) f32  running sum-of-squares accumulator
    l = pl.program_id(1)

    @pl.when(l == 0)
    def _():
        sum_ref[...] = jnp.zeros_like(sum_ref)
        sq_ref[...] = jnp.zeros_like(sq_ref)

    x = x_ref[...].astype(jnp.float32)                       # (tb, tl, Dp)
    sum_ref[...] += jnp.sum(x, axis=1)                       # sublane reduction
    sq_ref[...] += jnp.sum(x * x, axis=1)

    @pl.when(l == pl.num_programs(1) - 1)
    def _():
        s = sum_ref[...]
        mean = s * inv_l                                      # (tb, Dp)
        # One-pass unbiased variance; clamp: rounding can push it slightly < 0.
        # TODO(synk): for |mean| >> std inputs a shifted/chunked two-pass is
        # numerically safer than this one-pass form.
        var = jnp.maximum(sq_ref[...] - s * mean, 0.0) * inv_lm1
        std = jnp.sqrt(var)
        logits = (jnp.dot(mean, wm_ref[...], preferred_element_type=jnp.float32)
                  + jnp.dot(std, ws_ref[...], preferred_element_type=jnp.float32)
                  + b_ref[...])                               # (tb, Dp)
        gate = jax.nn.sigmoid(logits)
        o_ref[...] = (gate * mean + (1.0 - gate) * std).astype(o_ref.dtype)


def gated_statistical_pool(x_ncl, w, b, *, tb=None, tl=None):
    """Gated statistical pooling.

    x_ncl: (B, D, L) input in the PyTorch NCL layout (any float dtype).
    w:     (D, 2D)   torch Linear weight.
    b:     (D,)      torch Linear bias.
    Returns (B, D) in x's dtype.
    """
    B, D, L = x_ncl.shape
    assert L > 1, "unbiased std needs L > 1"
    assert w.shape == (D, 2 * D) and b.shape == (D,)

    # ---- tile sizing -------------------------------------------------------
    Dp = _round_up(D, 128)                       # lane-dense channel axis
    if tb is None:
        # Target 128 batch rows per tile (keep >=2 batch grid steps when B is
        # large so both v7x TensorCores get work); never pad beyond round_up(B,8).
        tb = min(128, _round_up(B, 8))
    tb = max(8, min(_round_up(tb, 8), _round_up(B, 8)))
    if tl is None:
        # ~2 MiB f32-equivalent per x block (bf16 blocks are half that); sized
        # conservatively for v7x's 64 MiB VMEM as well.
        budget = 2 * 1024 * 1024
        tl = max(8, (budget // (tb * Dp * 4)) // 8 * 8)
    tl = max(8, _round_up(tl, 8))
    tl = min(tl, _round_up(L, 8))

    Bp = _round_up(B, tb)
    Lp = _round_up(L, tl)

    # ---- layout plumbing (plain XLA, outside the kernel) -------------------
    x = jnp.transpose(x_ncl, (0, 2, 1))          # NCL -> NLC (B, L, D)
    x = jnp.pad(x, ((0, Bp - B), (0, Lp - L), (0, Dp - D)))

    # Split the Linear weight once:  stats @ W.T = mean @ W[:, :D].T + std @ W[:, D:].T
    w_mean = jnp.pad(jnp.transpose(w[:, :D]).astype(jnp.float32),
                     ((0, Dp - D), (0, Dp - D)))
    w_std = jnp.pad(jnp.transpose(w[:, D:]).astype(jnp.float32),
                    ((0, Dp - D), (0, Dp - D)))
    bias = jnp.pad(b.astype(jnp.float32), (0, Dp - D)).reshape(1, Dp)

    grid = (Bp // tb, Lp // tl)

    # VMEM budget: double-buffered x tiles + resident weights/bias + output +
    # accumulators, with headroom; capped well under v7x's 64 MiB.
    itemsize = jnp.dtype(x.dtype).itemsize
    vmem_bytes = (2 * tb * tl * Dp * itemsize      # x (double-buffered)
                  + 2 * Dp * Dp * 4 + Dp * 4       # wm, ws, bias (resident)
                  + 2 * tb * Dp * itemsize         # output (double-buffered)
                  + 2 * tb * Dp * 4)               # accumulators
    vmem_limit = int(min(max(2 * vmem_bytes, 4 << 20), 32 << 20))

    kernel = functools.partial(_gsp_kernel, inv_l=1.0 / L, inv_lm1=1.0 / (L - 1))
    out = pl.pallas_call(
        kernel,
        out_shape=jax.ShapeDtypeStruct((Bp, Dp), x.dtype),
        grid=grid,
        in_specs=[
            pl.BlockSpec((tb, tl, Dp), lambda i, l: (i, l, 0)),
            pl.BlockSpec((Dp, Dp), lambda i, l: (0, 0)),   # resident across grid
            pl.BlockSpec((Dp, Dp), lambda i, l: (0, 0)),
            pl.BlockSpec((1, Dp), lambda i, l: (0, 0)),
        ],
        out_specs=pl.BlockSpec((tb, Dp), lambda i, l: (i, 0)),
        scratch_shapes=[
            pltpu.VMEM((tb, Dp), jnp.float32),             # running sum
            pltpu.VMEM((tb, Dp), jnp.float32),             # running sum of squares
        ],
        compiler_params=pltpu.CompilerParams(
            dimension_semantics=("parallel", "arbitrary"),
            vmem_limit_bytes=vmem_limit),
    )(x, w_mean, w_std, bias)
    return out[:B, :D]                                      # strip padding


def reference_ncl(x_ncl, w, b):
    """Pure-JAX reference matching the PyTorch forward (NCL input)."""
    mean = jnp.mean(x_ncl, axis=-1)
    std = jnp.std(x_ncl, axis=-1, ddof=1)        # torch.std default: unbiased
    stats = jnp.concatenate([mean, std], axis=-1)
    gate = jax.nn.sigmoid(stats @ w.T + b)
    return gate * mean + (1.0 - gate) * std


if __name__ == "__main__":
    key = jax.random.PRNGKey(0)
    kx, kw, kb, kx2 = jax.random.split(key, 4)

    # Case 1: small f32 shapes matching the module (embed_dim=32, L=16, B=2).
    B, D, L = 2, 32, 16
    x_ncl = jax.random.normal(kx, (B, D, L), jnp.float32)
    bound = 1.0 / (2 * D) ** 0.5                             # torch Linear init bound
    w = jax.random.uniform(kw, (D, 2 * D), jnp.float32, -bound, bound)
    b = jax.random.uniform(kb, (D,), jnp.float32, -bound, bound)

    out = jax.block_until_ready(gated_statistical_pool(x_ncl, w, b))
    ref = reference_ncl(x_ncl, w, b)
    assert out.shape == (B, D), out.shape
    assert jnp.allclose(out, ref, atol=1e-4, rtol=1e-4), (
        float(jnp.max(jnp.abs(out - ref))))

    # Case 2: bf16 input, L not a multiple of the L tile -> exercises the
    # multi-step running-accumulator path and zero L-padding.
    B2, L2 = 3, 40
    x2_ncl = jax.random.normal(kx2, (B2, D, L2), jnp.float32).astype(jnp.bfloat16)
    out2 = jax.block_until_ready(gated_statistical_pool(x2_ncl, w, b, tl=16))
    ref2 = reference_ncl(x2_ncl.astype(jnp.float32), w, b)
    assert out2.shape == (B2, D), out2.shape
    assert jnp.allclose(out2.astype(jnp.float32), ref2, atol=1e-2, rtol=1e-2), (
        float(jnp.max(jnp.abs(out2.astype(jnp.float32) - ref2))))

    print("KERNEL_OK")
</pallas_src>

<mosaic_0001>
module attributes {stable_mosaic.version = 11 : i64} {
  func.func @_gsp_kernel(%arg0: i32, %arg1: i32, %arg2: memref<8x16x128xf32, #tpu.memory_space<vmem>>, %arg3: memref<128x128xf32, #tpu.memory_space<vmem>>, %arg4: memref<128x128xf32, #tpu.memory_space<vmem>>, %arg5: memref<1x128xf32, #tpu.memory_space<vmem>>, %arg6: memref<8x128xf32, #tpu.memory_space<vmem>>, %arg7: memref<8x128xf32, #tpu.memory_space<vmem>>, %arg8: memref<8x128xf32, #tpu.memory_space<vmem>>) attributes {dimension_semantics = [#tpu.dimension_semantics<parallel>, #tpu.dimension_semantics<arbitrary>], iteration_bounds = array<i64: 1, 1>, scalar_prefetch = 0 : i64, scratch_operands = 2 : i64, tpu.core_type = #tpu.core_type<tc>, window_params = [{transform_indices = @transform_0, window_bounds = array<i64: 8, 16, 128>}, {pipeline_mode = #tpu.pipeline_mode<synchronous>, transform_indices = @transform_1, window_bounds = array<i64: 128, 128>}, {pipeline_mode = #tpu.pipeline_mode<synchronous>, transform_indices = @transform_2, window_bounds = array<i64: 128, 128>}, {pipeline_mode = #tpu.pipeline_mode<synchronous>, transform_indices = @transform_3, window_bounds = array<i64: 1, 128>}, {transform_indices = @transform_4, window_bounds = array<i64: 8, 128>}]} {
    %c0_i32 = arith.constant 0 : i32
    %0 = arith.cmpi eq, %arg1, %c0_i32 : i32
    %1 = arith.extui %0 : i1 to i32
    %c0_i32_0 = arith.constant 0 : i32
    %2 = arith.cmpi ne, %1, %c0_i32_0 : i32
    scf.if %2 {
      %cst_14 = arith.constant 0.000000e+00 : f32
      %16 = vector.broadcast %cst_14 : f32 to vector<8x128xf32>
      %c0_15 = arith.constant 0 : index
      %c0_16 = arith.constant 0 : index
      %17 = vector.load %arg7[%c0_15, %c0_16] : memref<8x128xf32, #tpu.memory_space<vmem>>, vector<8x128xf32>
      tpu.vector_store %arg7[%c0_15, %c0_16], %16 {strides = array<i32>} : memref<8x128xf32, #tpu.memory_space<vmem>>, vector<8x128xf32>,
      %cst_17 = arith.constant 0.000000e+00 : f32
      %18 = vector.broadcast %cst_17 : f32 to vector<8x128xf32>
      %c0_18 = arith.constant 0 : index
      %c0_19 = arith.constant 0 : index
      %19 = vector.load %arg8[%c0_18, %c0_19] : memref<8x128xf32, #tpu.memory_space<vmem>>, vector<8x128xf32>
      tpu.vector_store %arg8[%c0_18, %c0_19], %18 {strides = array<i32>} : memref<8x128xf32, #tpu.memory_space<vmem>>, vector<8x128xf32>,
    } else {
    }
    %c0 = arith.constant 0 : index
    %c0_1 = arith.constant 0 : index
    %c0_2 = arith.constant 0 : index
    %3 = vector.load %arg2[%c0, %c0_1, %c0_2] : memref<8x16x128xf32, #tpu.memory_space<vmem>>, vector<8x16x128xf32>
    %c0_3 = arith.constant 0 : index
    %c0_4 = arith.constant 0 : index
    %4 = vector.load %arg7[%c0_3, %c0_4] : memref<8x128xf32, #tpu.memory_space<vmem>>, vector<8x128xf32>
    %cst = arith.constant dense<0.000000e+00> : vector<8x128xf32>
    %5 = vector.multi_reduction <add>, %3, %cst [1] : vector<8x16x128xf32> to vector<8x128xf32>
    %6 = arith.addf %4, %5 : vector<8x128xf32>
    %c0_5 = arith.constant 0 : index
    %c0_6 = arith.constant 0 : index
    %7 = vector.load %arg7[%c0_5, %c0_6] : memref<8x128xf32, #tpu.memory_space<vmem>>, vector<8x128xf32>
    tpu.vector_store %arg7[%c0_5, %c0_6], %6 {strides = array<i32>} : memref<8x128xf32, #tpu.memory_space<vmem>>, vector<8x128xf32>,
    %c0_7 = arith.constant 0 : index
    %c0_8 = arith.constant 0 : index
    %8 = vector.load %arg8[%c0_7, %c0_8] : memref<8x128xf32, #tpu.memory_space<vmem>>, vector<8x128xf32>
    %9 = arith.mulf %3, %3 : vector<8x16x128xf32>
    %cst_9 = arith.constant dense<0.000000e+00> : vector<8x128xf32>
    %10 = vector.multi_reduction <add>, %9, %cst_9 [1] : vector<8x16x128xf32> to vector<8x128xf32>
    %11 = arith.addf %8, %10 : vector<8x128xf32>
    %c0_10 = arith.constant 0 : index
    %c0_11 = arith.constant 0 : index
    %12 = vector.load %arg8[%c0_10, %c0_11] : memref<8x128xf32, #tpu.memory_space<vmem>>, vector<8x128xf32>
    tpu.vector_store %arg8[%c0_10, %c0_11], %11 {strides = array<i32>} : memref<8x128xf32, #tpu.memory_space<vmem>>, vector<8x128xf32>,
    %c0_i32_12 = arith.constant 0 : i32
    %13 = arith.cmpi eq, %arg1, %c0_i32_12 : i32
    %14 = arith.extui %13 : i1 to i32
    %c0_i32_13 = arith.constant 0 : i32
    %15 = arith.cmpi ne, %14, %c0_i32_13 : i32
    scf.if %15 {
      %c0_14 = arith.constant 0 : index
      %c0_15 = arith.constant 0 : index
      %16 = vector.load %arg7[%c0_14, %c0_15] : memref<8x128xf32, #tpu.memory_space<vmem>>, vector<8x128xf32>
      %cst_16 = arith.constant 6.250000e-02 : f32
      %17 = vector.broadcast %cst_16 : f32 to vector<8x128xf32>
      %18 = arith.mulf %16, %17 : vector<8x128xf32>
      %c0_17 = arith.constant 0 : index
      %c0_18 = arith.constant 0 : index
      %19 = vector.load %arg8[%c0_17, %c0_18] : memref<8x128xf32, #tpu.memory_space<vmem>>, vector<8x128xf32>
      %20 = arith.mulf %16, %18 : vector<8x128xf32>
      %21 = arith.subf %19, %20 : vector<8x128xf32>
      %cst_19 = arith.constant 0.000000e+00 : f32
      %22 = vector.broadcast %cst_19 : f32 to vector<8x128xf32>
      %23 = arith.maximumf %21, %22 : vector<8x128xf32>
      %cst_20 = arith.constant 0.0666666701 : f32
      %24 = vector.broadcast %cst_20 : f32 to vector<8x128xf32>
      %25 = arith.mulf %23, %24 : vector<8x128xf32>
      %26 = math.sqrt %25 : vector<8x128xf32>
      %c0_21 = arith.constant 0 : index
      %c0_22 = arith.constant 0 : index
      %27 = vector.load %arg3[%c0_21, %c0_22] : memref<128x128xf32, #tpu.memory_space<vmem>>, vector<128x128xf32>
      %cst_23 = arith.constant dense<0.000000e+00> : vector<8x128xf32>
      %28 = tpu.matmul %18, %27, %cst_23 {dimension_numbers = #tpu.dot_dimension_numbers<[1], [0], [0], [1], [0, 0, 1, 1], [], []>} : vector<8x128xf32>, vector<128x128xf32>, vector<8x128xf32> -> vector<8x128xf32>
      %c0_24 = arith.constant 0 : index
      %c0_25 = arith.constant 0 : index
      %29 = vector.load %arg4[%c0_24, %c0_25] : memref<128x128xf32, #tpu.memory_space<vmem>>, vector<128x128xf32>
      %cst_26 = arith.constant dense<0.000000e+00> : vector<8x128xf32>
      %30 = tpu.matmul %26, %29, %cst_26 {dimension_numbers = #tpu.dot_dimension_numbers<[1], [0], [0], [1], [0, 0, 1, 1], [], []>} : vector<8x128xf32>, vector<128x128xf32>, vector<8x128xf32> -> vector<8x128xf32>
      %31 = arith.addf %28, %30 : vector<8x128xf32>
      %c0_27 = arith.constant 0 : index
      %c0_28 = arith.constant 0 : index
      %32 = vector.load %arg5[%c0_27, %c0_28] : memref<1x128xf32, #tpu.memory_space<vmem>>, vector<1x128xf32>
      %33 = vector.broadcast %32 : vector<1x128xf32> to vector<8x128xf32>
      %34 = arith.addf %31, %33 : vector<8x128xf32>
      %35 = arith.negf %34 : vector<8x128xf32>
      %36 = math.exp %35 : vector<8x128xf32>
      %cst_29 = arith.constant 1.000000e+00 : f32
      %37 = vector.broadcast %cst_29 : f32 to vector<8x128xf32>
      %38 = arith.addf %37, %36 : vector<8x128xf32>
      %39 = arith.divf %37, %38 : vector<8x128xf32>
      %40 = arith.mulf %39, %18 : vector<8x128xf32>
      %cst_30 = arith.constant 1.000000e+00 : f32
      %41 = vector.broadcast %cst_30 : f32 to vector<8x128xf32>
      %42 = arith.subf %41, %39 : vector<8x128xf32>
      %43 = arith.mulf %42, %26 : vector<8x128xf32>
      %44 = arith.addf %40, %43 : vector<8x128xf32>
      %c0_31 = arith.constant 0 : index
      %c0_32 = arith.constant 0 : index
      %45 = vector.load %arg6[%c0_31, %c0_32] : memref<8x128xf32, #tpu.memory_space<vmem>>, vector<8x128xf32>
      tpu.vector_store %arg6[%c0_31, %c0_32], %44 {strides = array<i32>} : memref<8x128xf32, #tpu.memory_space<vmem>>, vector<8x128xf32>,
    } else {
    }
    return
  }
  func.func @transform_0(%arg0: i32, %arg1: i32) -> (i32, i32, i32) {
    %c0_i32 = arith.constant 0 : i32
    %c0_i32_0 = arith.constant 0 : i32
    return %arg0, %arg1, %c0_i32 : i32, i32, i32
  }
  func.func @transform_1(%arg0: i32, %arg1: i32) -> (i32, i32) {
    %c0_i32 = arith.constant 0 : i32
    %c0_i32_0 = arith.constant 0 : i32
    %c0_i32_1 = arith.constant 0 : i32
    return %c0_i32, %c0_i32_0 : i32, i32
  }
  func.func @transform_2(%arg0: i32, %arg1: i32) -> (i32, i32) {
    %c0_i32 = arith.constant 0 : i32
    %c0_i32_0 = arith.constant 0 : i32
    %c0_i32_1 = arith.constant 0 : i32
    return %c0_i32, %c0_i32_0 : i32, i32
  }
  func.func @transform_3(%arg0: i32, %arg1: i32) -> (i32, i32) {
    %c0_i32 = arith.constant 0 : i32
    %c0_i32_0 = arith.constant 0 : i32
    %c0_i32_1 = arith.constant 0 : i32
    return %c0_i32, %c0_i32_0 : i32, i32
  }
  func.func @transform_4(%arg0: i32, %arg1: i32) -> (i32, i32) {
    %c0_i32 = arith.constant 0 : i32
    %c0_i32_0 = arith.constant 0 : i32
    return %arg0, %c0_i32 : i32, i32
  }
}

</mosaic_0001>

<llo_original>
// kernel: tpu_custom_call.1
$region0: #{tpu_custom_call.1}
  #allocation0 [shape = 'u32[]', space=smem, size = 0x4, offset = 0x4, fixed_abs, tag = 'smem constant byte address 0x4 - core index']
  #allocation1 [shape = 'u32[144,128]{1,0:T(1,128)}', space=vmem, size = 0x12000, scoped, tag = 'internal scratch']
  #allocation2 [shape = 'f32[8,128]{1,0:T(8,128)}', space=vmem, size = 0x1000, scoped, tag = 'scratch operand']
  #allocation3 [shape = 'f32[8,128]{1,0:T(8,128)}', space=vmem, size = 0x1000, scoped, tag = 'scratch operand']
  %s0 = inlined_call_operand.hbm [shape: f32[8,16,128], index: 0, kind: input, shape index: {}]
  %s1 = inlined_call_operand.hbm [shape: f32[128,128], index: 1, kind: input, shape index: {}]
  %s2 = inlined_call_operand.hbm [shape: f32[128,128], index: 2, kind: input, shape index: {}]
  %s3 = inlined_call_operand.vmem [shape: f32[1,128], index: 3, kind: input, shape index: {}]
  %s4 = inlined_call_operand.hbm [shape: f32[8,128], index: 4, kind: output, shape index: {}]
  %s5 = sld [smem:[#allocation0]]
  $region46: #{tpu_custom_call.1} parent=0
    _
  %s7 = ssub.s32 1, %s5
  %s8 = scalar_select 0, %s7, %s5
  $region1: #{tpu_custom_call.1} parent=0
    #allocation4 [shape = 'u8[65536]{0}', space=vmem, size = 0x10000, scoped, tag = 'input window, operand 0, single buffered']
    #allocation5 [shape = 's32[1]{0}', space=sflag, size = 0x4, scoped, tag = 'scoped memory for tpu_custom_call.1']
    #allocation6 [shape = 's32[1]{0}', space=sflag, size = 0x4, scoped, tag = 'scoped memory for tpu_custom_call.1']
    #allocation7 [shape = 'u8[65536]{0}', space=vmem, size = 0x10000, scoped, tag = 'input window, operand 1, single buffered']
    #allocation8 [shape = 's32[1]{0}', space=sflag, size = 0x4, scoped, tag = 'scoped memory for tpu_custom_call.1']
    #allocation9 [shape = 'u8[65536]{0}', space=vmem, size = 0x10000, scoped, tag = 'input window, operand 2, single buffered']
    #allocation10 [shape = 'u8[4096]{0}', space=vmem, size = 0x1000, scoped, tag = 'output window, operand 0, single buffered']
    %9 = vsyncpa [#allocation5], 0
    %10 = vsyncpa [#allocation8], 0
    %11 = vsyncpa [#allocation6], 0
    // Predicated region
    $region2: #{tpu_custom_call.1} parent=1 // pred_check
      _
    $region3: #{tpu_custom_call.1} parent=1 // pred_check_branch
      %13 = sbr.rel (0) target = $region5
    $region4: #{tpu_custom_call.1} parent=1 // pred_region
      %s15 = ssub.s32 2048, 2048
      %16 = vsyncadd [#allocation5], %s15
      %s17 = sshll.u32 [#allocation4], 4
      %s18 = int_to_ptr.vmem [resolvable:$true] %s17
      %23 = dma.hbm_to_vmem [thread:$0]  %s0, 2048, %s18, [#allocation5], 128, 128, 8
    $region5: #{tpu_custom_call.1} parent=1 // pred_fallthru
      _
    // Predicated region
    $region6: #{tpu_custom_call.1} parent=1 // pred_check
      _
    $region7: #{tpu_custom_call.1} parent=1 // pred_check_branch
      %25 = sbr.rel (0) target = $region9
    $region8: #{tpu_custom_call.1} parent=1 // pred_region
      %s27 = ssub.s32 2048, 2048
      %28 = vsyncadd [#allocation8], %s27
      %s29 = sshll.u32 [#allocation7], 4
      %s30 = int_to_ptr.vmem [resolvable:$true] %s29
      %35 = dma.hbm_to_vmem [thread:$0]  %s1, 2048, %s30, [#allocation8], 128, 128, 8
    $region9: #{tpu_custom_call.1} parent=1 // pred_fallthru
      _
    // Predicated region
    $region10: #{tpu_custom_call.1} parent=1 // pred_check
      _
    $region11: #{tpu_custom_call.1} parent=1 // pred_check_branch
      %37 = sbr.rel (0) target = $region13
    $region12: #{tpu_custom_call.1} parent=1 // pred_region
      %s39 = ssub.s32 2048, 2048
      %40 = vsyncadd [#allocation8], %s39
      %s41 = sshll.u32 [#allocation9], 4
      %s42 = int_to_ptr.vmem [resolvable:$true] %s41
      %47 = dma.hbm_to_vmem [thread:$0]  %s2, 2048, %s42, [#allocation8], 128, 128, 8
    $region13: #{tpu_custom_call.1} parent=1 // pred_fallthru
      _
    // Predicated region
    $region14: #{tpu_custom_call.1} parent=1 // pred_check
      _
    $region15: #{tpu_custom_call.1} parent=1 // pred_check_branch
      %49 = sbr.rel (0) target = $region17
    $region16: #{tpu_custom_call.1} parent=1 // pred_region
      _
    $region17: #{tpu_custom_call.1} parent=1 // pred_fallthru
      _
    // Predicated region
    $region18: #{tpu_custom_call.1} parent=1 // pred_check
      _
    $region19: #{tpu_custom_call.1} parent=1 // pred_check_branch
      %51 = sbr.rel (0) target = $region21
    $region20: #{tpu_custom_call.1} parent=1 // pred_region
      %52 = dma.done [#allocation5], 2048
    $region21: #{tpu_custom_call.1} parent=1 // pred_fallthru
      _
    // Predicated region
    $region22: #{tpu_custom_call.1} parent=1 // pred_check
      _
    $region23: #{tpu_custom_call.1} parent=1 // pred_check_branch
      %54 = sbr.rel (0) target = $region25
    $region24: #{tpu_custom_call.1} parent=1 // pred_region
      %55 = dma.done [#allocation8], 2048
    $region25: #{tpu_custom_call.1} parent=1 // pred_fallthru
      _
    // Predicated region
    $region26: #{tpu_custom_call.1} parent=1 // pred_check
      _
    $region27: #{tpu_custom_call.1} parent=1 // pred_check_branch
      %57 = sbr.rel (0) target = $region29
    $region28: #{tpu_custom_call.1} parent=1 // pred_region
      %58 = dma.done [#allocation8], 2048
    $region29: #{tpu_custom_call.1} parent=1 // pred_fallthru
      _
    %p59 = scmp.eq.s32.totalorder 0, 0
    // Predicated region
    $region30: #{tpu_custom_call.1} parent=1 // pred_check
      %p60 = pneg %p59
    $region31: #{tpu_custom_call.1} parent=1 // pred_check_branch
      %62 = sbr.rel (%p60) target = $region33
    $region32: #{tpu_custom_call.1} parent=1 // pred_region
      %63 = vst [vmem:[#allocation2] sm:$0xff] 0.0
      %64 = vst [vmem:[#allocation3] sm:$0xff] 0.0
    $region33: #{tpu_custom_call.1} parent=1 // pred_fallthru
      _
    %v65 = vld [vmem:[#allocation4] sm:$0xff]
    %v66 = vld [vmem:[#allocation4 + $0x8] sm:$0xff]
    %v67 = vld [vmem:[#allocation4 + $0x10] sm:$0xff]
    %v68 = vld [vmem:[#allocation4 + $0x18] sm:$0xff]
    %v69 = vld [vmem:[#allocation4 + $0x20] sm:$0xff]
    %v70 = vld [vmem:[#allocation4 + $0x28] sm:$0xff]
    %v71 = vld [vmem:[#allocation4 + $0x30] sm:$0xff]
    %v72 = vld [vmem:[#allocation4 + $0x38] sm:$0xff]
    %v73 = vld [vmem:[#allocation4 + $0x40] sm:$0xff]
    %v74 = vld [vmem:[#allocation4 + $0x48] sm:$0xff]
    %v75 = vld [vmem:[#allocation4 + $0x50] sm:$0xff]
    %v76 = vld [vmem:[#allocation4 + $0x58] sm:$0xff]
    %v77 = vld [vmem:[#allocation4 + $0x60] sm:$0xff]
    %v78 = vld [vmem:[#allocation4 + $0x68] sm:$0xff]
    %v79 = vld [vmem:[#allocation4 + $0x70] sm:$0xff]
    %v80 = vld [vmem:[#allocation4 + $0x78] sm:$0xff]
    %v81 = vld [vmem:[#allocation2] sm:$0xff]
    %v82 = vadd.f32 %v65, %v66
    %v83 = vrot.slane %v82, 4
    %v84 = vadd.f32 %v82, %v83
    %v85 = vrot.slane %v84, 2
    %v86 = vadd.f32 %v84, %v85
    %v87 = vrot.slane %v86, 1
    %v88 = vadd.f32 %v86, %v87
    %v89 = vadd.f32 %v67, %v68
    %v90 = vrot.slane %v89, 4
    %v91 = vadd.f32 %v89, %v90
    %v92 = vrot.slane %v91, 2
    %v93 = vadd.f32 %v91, %v92
    %v94 = vrot.slane %v93, 1
    %v95 = vadd.f32 %v93, %v94
    %v96 = vadd.f32 %v69, %v70
    %v97 = vrot.slane %v96, 4
    %v98 = vadd.f32 %v96, %v97
    %v99 = vrot.slane %v98, 2
    %v100 = vadd.f32 %v98, %v99
    %v101 = vrot.slane %v100, 1
    %v102 = vadd.f32 %v100, %v101
    %v103 = vadd.f32 %v71, %v72
    %v104 = vrot.slane %v103, 4
    %v105 = vadd.f32 %v103, %v104
    %v106 = vrot.slane %v105, 2
    %v107 = vadd.f32 %v105, %v106
    %v108 = vrot.slane %v107, 1
    %v109 = vadd.f32 %v107, %v108
    %v110 = vadd.f32 %v73, %v74
    %v111 = vrot.slane %v110, 4
    %v112 = vadd.f32 %v110, %v111
    %v113 = vrot.slane %v112, 2
    %v114 = vadd.f32 %v112, %v113
    %v115 = vrot.slane %v114, 1
    %v116 = vadd.f32 %v114, %v115
    %v117 = vadd.f32 %v75, %v76
    %v118 = vrot.slane %v117, 4
    %v119 = vadd.f32 %v117, %v118
    %v120 = vrot.slane %v119, 2
    %v121 = vadd.f32 %v119, %v120
    %v122 = vrot.slane %v121, 1
    %v123 = vadd.f32 %v121, %v122
    %v124 = vadd.f32 %v77, %v78
    %v125 = vrot.slane %v124, 4
    %v126 = vadd.f32 %v124, %v125
    %v127 = vrot.slane %v126, 2
    %v128 = vadd.f32 %v126, %v127
    %v129 = vrot.slane %v128, 1
    %v130 = vadd.f32 %v128, %v129
    %v131 = vadd.f32 %v79, %v80
    %v132 = vrot.slane %v131, 4
    %v133 = vadd.f32 %v131, %v132
    %v134 = vrot.slane %v133, 2
    %v135 = vadd.f32 %v133, %v134
    %v136 = vrot.slane %v135, 1
    %v137 = vadd.f32 %v135, %v136
    %vm146 = vcmask 1041409
    %v147 = vsel %vm146, %v95, %v88
    %vm148 = vcmask 1042434
    %v149 = vsel %vm148, %v102, %v147
    %vm150 = vcmask 1043459
    %v151 = vsel %vm150, %v109, %v149
    %vm152 = vcmask 1044484
    %v153 = vsel %vm152, %v116, %v151
    %vm154 = vcmask 1045509
    %v155 = vsel %vm154, %v123, %v153
    %vm156 = vcmask 1046534
    %v157 = vsel %vm156, %v130, %v155
    %vm158 = vcmask 1047559
    %v159 = vsel %vm158, %v137, %v157
    %v161 = vadd.f32 %v81, %v159
    %162 = vst [vmem:[#allocation2] sm:$0xff] %v161
    %v163 = vld [vmem:[#allocation3] sm:$0xff]
    %v164 = vmul.f32 %v65, %v65
    %v165 = vmul.f32 %v66, %v66
    %v166 = vmul.f32 %v67, %v67
    %v167 = vmul.f32 %v68, %v68
    %v168 = vmul.f32 %v69, %v69
    %v169 = vmul.f32 %v70, %v70
    %v170 = vmul.f32 %v71, %v71
    %v171 = vmul.f32 %v72, %v72
    %v172 = vmul.f32 %v73, %v73
    %v173 = vmul.f32 %v74, %v74
    %v174 = vmul.f32 %v75, %v75
    %v175 = vmul.f32 %v76, %v76
    %v176 = vmul.f32 %v77, %v77
    %v177 = vmul.f32 %v78, %v78
    %v178 = vmul.f32 %v79, %v79
    %v179 = vmul.f32 %v80, %v80
    %v180 = vadd.f32 %v164, %v165
    %v181 = vrot.slane %v180, 4
    %v182 = vadd.f32 %v180, %v181
    %v183 = vrot.slane %v182, 2
    %v184 = vadd.f32 %v182, %v183
    %v185 = vrot.slane %v184, 1
    %v186 = vadd.f32 %v184, %v185
    %v187 = vadd.f32 %v166, %v167
    %v188 = vrot.slane %v187, 4
    %v189 = vadd.f32 %v187, %v188
    %v190 = vrot.slane %v189, 2
    %v191 = vadd.f32 %v189, %v190
    %v192 = vrot.slane %v191, 1
    %v193 = vadd.f32 %v191, %v192
    %v194 = vadd.f32 %v168, %v169
    %v195 = vrot.slane %v194, 4
    %v196 = vadd.f32 %v194, %v195
    %v197 = vrot.slane %v196, 2
    %v198 = vadd.f32 %v196, %v197
    %v199 = vrot.slane %v198, 1
    %v200 = vadd.f32 %v198, %v199
    %v201 = vadd.f32 %v170, %v171
    %v202 = vrot.slane %v201, 4
    %v203 = vadd.f32 %v201, %v202
    %v204 = vrot.slane %v203, 2
    %v205 = vadd.f32 %v203, %v204
    %v206 = vrot.slane %v205, 1
    %v207 = vadd.f32 %v205, %v206
    %v208 = vadd.f32 %v172, %v173
    %v209 = vrot.slane %v208, 4
    %v210 = vadd.f32 %v208, %v209
    %v211 = vrot.slane %v210, 2
    %v212 = vadd.f32 %v210, %v211
    %v213 = vrot.slane %v212, 1
    %v214 = vadd.f32 %v212, %v213
    %v215 = vadd.f32 %v174, %v175
    %v216 = vrot.slane %v215, 4
    %v217 = vadd.f32 %v215, %v216
    %v218 = vrot.slane %v217, 2
    %v219 = vadd.f32 %v217, %v218
    %v220 = vrot.slane %v219, 1
    %v221 = vadd.f32 %v219, %v220
    %v222 = vadd.f32 %v176, %v177
    %v223 = vrot.slane %v222, 4
    %v224 = vadd.f32 %v222, %v223
    %v225 = vrot.slane %v224, 2
    %v226 = vadd.f32 %v224, %v225
    %v227 = vrot.slane %v226, 1
    %v228 = vadd.f32 %v226, %v227
    %v229 = vadd.f32 %v178, %v179
    %v230 = vrot.slane %v229, 4
    %v231 = vadd.f32 %v229, %v230
    %v232 = vrot.slane %v231, 2
    %v233 = vadd.f32 %v231, %v232
    %v234 = vrot.slane %v233, 1
    %v235 = vadd.f32 %v233, %v234
    %v244 = vsel %vm146, %v193, %v186
    %v245 = vsel %vm148, %v200, %v244
    %v246 = vsel %vm150, %v207, %v245
    %v247 = vsel %vm152, %v214, %v246
    %v248 = vsel %vm154, %v221, %v247
    %v249 = vsel %vm156, %v228, %v248
    %v250 = vsel %vm158, %v235, %v249
    %v252 = vadd.f32 %v163, %v250
    %253 = vst [vmem:[#allocation3] sm:$0xff] %v252
    // Predicated region
    $region34: #{tpu_custom_call.1} parent=1 // pred_check
      %p254 = pneg %p59
    $region35: #{tpu_custom_call.1} parent=1 // pred_check_branch
      %256 = sbr.rel (%p254) target = $region37
    $region36: #{tpu_custom_call.1} parent=1 // pred_region
      %v257 = vld [vmem:[#allocation2] sm:$0xff]
      %v258 = vmul.f32 %v257, 0.0625
      %v259 = vld [vmem:[#allocation3] sm:$0xff]
      %v260 = vmul.f32 %v257, %v258
      %v261 = vsub.f32 %v259, %v260
      %v262 = vmax.f32 %v261, 0.0
      %v263 = vmul.f32 %v262, 0.06666667
      %v264 = vrsqrt.pop %v263
      %v265 = vmul.f32 %v263, %v264
      %vm266 = vcmp.eq.f32.partialorder %v263, inf
      %v267 = vsel %vm266, %v263, %v265
      %vm268 = vcmp.eq.f32.partialorder %v263, 0.0
      %v269 = vand.u32 %v263, 2147483648
      %v270 = vsel %vm268, %v269, %v267
      %v271 = vld [vmem:[#allocation7] sm:$0xff]
      %v272 = vld [vmem:[#allocation7 + $0x8] sm:$0xff]
      %v273 = vld [vmem:[#allocation7 + $0x10] sm:$0xff]
      %v274 = vld [vmem:[#allocation7 + $0x18] sm:$0xff]
      %v275 = vld [vmem:[#allocation7 + $0x20] sm:$0xff]
      %v276 = vld [vmem:[#allocation7 + $0x28] sm:$0xff]
      %v277 = vld [vmem:[#allocation7 + $0x30] sm:$0xff]
      %v278 = vld [vmem:[#allocation7 + $0x38] sm:$0xff]
      %v279 = vld [vmem:[#allocation7 + $0x40] sm:$0xff]
      %v280 = vld [vmem:[#allocation7 + $0x48] sm:$0xff]
      %v281 = vld [vmem:[#allocation7 + $0x50] sm:$0xff]
      %v282 = vld [vmem:[#allocation7 + $0x58] sm:$0xff]
      %v283 = vld [vmem:[#allocation7 + $0x60] sm:$0xff]
      %v284 = vld [vmem:[#allocation7 + $0x68] sm:$0xff]
      %v285 = vld [vmem:[#allocation7 + $0x70] sm:$0xff]
      %v286 = vld [vmem:[#allocation7 + $0x78] sm:$0xff]
      %v287 = vld [vmem:[#allocation9] sm:$0xff]
      %v288 = vld [vmem:[#allocation9 + $0x8] sm:$0xff]
      %v289 = vld [vmem:[#allocation9 + $0x10] sm:$0xff]
      %v290 = vld [vmem:[#allocation9 + $0x18] sm:$0xff]
      %v291 = vld [vmem:[#allocation9 + $0x20] sm:$0xff]
      %v292 = vld [vmem:[#allocation9 + $0x28] sm:$0xff]
      %v293 = vld [vmem:[#allocation9 + $0x30] sm:$0xff]
      %v294 = vld [vmem:[#allocation9 + $0x38] sm:$0xff]
      %v295 = vld [vmem:[#allocation9 + $0x40] sm:$0xff]
      %v296 = vld [vmem:[#allocation9 + $0x48] sm:$0xff]
      %v297 = vld [vmem:[#allocation9 + $0x50] sm:$0xff]
      %v298 = vld [vmem:[#allocation9 + $0x58] sm:$0xff]
      %v299 = vld [vmem:[#allocation9 + $0x60] sm:$0xff]
      %v300 = vld [vmem:[#allocation9 + $0x68] sm:$0xff]
      %v301 = vld [vmem:[#allocation9 + $0x70] sm:$0xff]
      %v302 = vld [vmem:[#allocation9 + $0x78] sm:$0xff]
      %303 = vmatprep.subr.mxu0 0.0
      %304 = vmatpush1.msra.mxu0 %v287
      %305 = vmatprep.subr.mxu0 0.0
      %306 = vmatpush1.msra.mxu0 %v288
      %307 = vmatprep.subr.mxu0 0.0
      %308 = vmatpush1.msra.mxu0 %v289
      %309 = vmatprep.subr.mxu0 0.0
      %310 = vmatpush1.msra.mxu0 %v290
      %311 = vmatprep.subr.mxu0 0.0
      %312 = vmatpush1.msra.mxu0 %v291
      %313 = vmatprep.subr.mxu0 0.0
      %314 = vmatpush1.msra.mxu0 %v292
      %315 = vmatprep.subr.mxu0 0.0
      %316 = vmatpush1.msra.mxu0 %v293
      %317 = vmatprep.subr.mxu0 0.0
      %318 = vmatpush1.msra.mxu0 %v294
      %319 = vmatprep.subr.mxu0 0.0
      %320 = vmatpush1.msra.mxu0 %v295
      %321 = vmatprep.subr.mxu0 0.0
      %322 = vmatpush1.msra.mxu0 %v296
      %323 = vmatprep.subr.mxu0 0.0
      %324 = vmatpush1.msra.mxu0 %v297
      %325 = vmatprep.subr.mxu0 0.0
      %326 = vmatpush1.msra.mxu0 %v298
      %327 = vmatprep.subr.mxu0 0.0
      %328 = vmatpush1.msra.mxu0 %v299
      %329 = vmatprep.subr.mxu0 0.0
      %330 = vmatpush1.msra.mxu0 %v300
      %331 = vmatprep.subr.mxu0 0.0
      %332 = vmatpush1.msra.mxu0 %v301
      %333 = vmatprep.subr.mxu0 0.0
      %334 = vmatpush1.msra.mxu0 %v302
      %335 = vmatprep.subr.mxu0 0.0
      %336 = vmatpush1.msra.mxu0 0.0
      %337 = vmatprep.subr.mxu0 0.0
      %338 = vmatpush1.msra.mxu0 0.0
      %339 = vmatprep.subr.mxu0 0.0
      %340 = vmatpush1.msra.mxu0 0.0
      %341 = vmatprep.subr.mxu0 0.0
      %342 = vmatpush1.msra.mxu0 0.0
      %343 = vmatprep.subr.mxu0 0.0
      %344 = vmatpush1.msra.mxu0 0.0
      %345 = vmatprep.subr.mxu0 0.0
      %346 = vmatpush1.msra.mxu0 0.0
      %347 = vmatprep.subr.mxu0 0.0
      %348 = vmatpush1.msra.mxu0 0.0
      %349 = vmatprep.subr.mxu0 0.0
      %350 = vmatpush1.msra.mxu0 0.0
      %351 = vmatprep.subr.mxu0 0.0
      %352 = vmatpush1.msra.mxu0 0.0
      %353 = vmatprep.subr.mxu0 0.0
      %354 = vmatpush1.msra.mxu0 0.0
      %355 = vmatprep.subr.mxu0 0.0
      %356 = vmatpush1.msra.mxu0 0.0
      %357 = vmatprep.subr.mxu0 0.0
      %358 = vmatpush1.msra.mxu0 0.0
      %359 = vmatprep.subr.mxu0 0.0
      %360 = vmatpush1.msra.mxu0 0.0
      %361 = vmatprep.subr.mxu0 0.0
      %362 = vmatpush1.msra.mxu0 0.0
      %363 = vmatprep.subr.mxu0 0.0
      %364 = vmatpush1.msra.mxu0 0.0
      %365 = vmatprep.subr.mxu0 0.0
      %366 = vmatpush1.msra.mxu0 0.0
      %367 = vmatprep.mubr.f32.mxu0 0.0
      %368 = vmatmul.mubr.f32.gmra.mrb[0].mxu0 %v270
      %v369 = vpop.f32.mrb[0].mxu0
      %v370 = vadd.f32 0.0, %v369
      %v371 = vpop.f32.mrb[0].mxu0
      %372 = vdwg.mxu0
      %373 = vmatprep.subr.mxu0 0.0
      %374 = vmatpush1.msra.mxu0 %v271
      %375 = vmatprep.subr.mxu0 0.0
      %376 = vmatpush1.msra.mxu0 %v272
      %377 = vmatprep.subr.mxu0 0.0
      %378 = vmatpush1.msra.mxu0 %v273
      %379 = vmatprep.subr.mxu0 0.0
      %380 = vmatpush1.msra.mxu0 %v274
      %381 = vmatprep.subr.mxu0 0.0
      %382 = vmatpush1.msra.mxu0 %v275
      %383 = vmatprep.subr.mxu0 0.0
      %384 = vmatpush1.msra.mxu0 %v276
      %385 = vmatprep.subr.mxu0 0.0
      %386 = vmatpush1.msra.mxu0 %v277
      %387 = vmatprep.subr.mxu0 0.0
      %388 = vmatpush1.msra.mxu0 %v278
      %389 = vmatprep.subr.mxu0 0.0
      %390 = vmatpush1.msra.mxu0 %v279
      %391 = vmatprep.subr.mxu0 0.0
      %392 = vmatpush1.msra.mxu0 %v280
      %393 = vmatprep.subr.mxu0 0.0
      %394 = vmatpush1.msra.mxu0 %v281
      %395 = vmatprep.subr.mxu0 0.0
      %396 = vmatpush1.msra.mxu0 %v282
      %397 = vmatprep.subr.mxu0 0.0
      %398 = vmatpush1.msra.mxu0 %v283
      %399 = vmatprep.subr.mxu0 0.0
      %400 = vmatpush1.msra.mxu0 %v284
      %401 = vmatprep.subr.mxu0 0.0
      %402 = vmatpush1.msra.mxu0 %v285
      %403 = vmatprep.subr.mxu0 0.0
      %404 = vmatpush1.msra.mxu0 %v286
      %405 = vmatprep.subr.mxu0 0.0
      %406 = vmatpush1.msra.mxu0 0.0
      %407 = vmatprep.subr.mxu0 0.0
      %408 = vmatpush1.msra.mxu0 0.0
      %409 = vmatprep.subr.mxu0 0.0
      %410 = vmatpush1.msra.mxu0 0.0
      %411 = vmatprep.subr.mxu0 0.0
      %412 = vmatpush1.msra.mxu0 0.0
      %413 = vmatprep.subr.mxu0 0.0
      %414 = vmatpush1.msra.mxu0 0.0
      %415 = vmatprep.subr.mxu0 0.0
      %416 = vmatpush1.msra.mxu0 0.0
      %417 = vmatprep.subr.mxu0 0.0
      %418 = vmatpush1.msra.mxu0 0.0
      %419 = vmatprep.subr.mxu0 0.0
      %420 = vmatpush1.msra.mxu0 0.0
      %421 = vmatprep.subr.mxu0 0.0
      %422 = vmatpush1.msra.mxu0 0.0
      %423 = vmatprep.subr.mxu0 0.0
      %424 = vmatpush1.msra.mxu0 0.0
      %425 = vmatprep.subr.mxu0 0.0
      %426 = vmatpush1.msra.mxu0 0.0
      %427 = vmatprep.subr.mxu0 0.0
      %428 = vmatpush1.msra.mxu0 0.0
      %429 = vmatprep.subr.mxu0 0.0
      %430 = vmatpush1.msra.mxu0 0.0
      %431 = vmatprep.subr.mxu0 0.0
      %432 = vmatpush1.msra.mxu0 0.0
      %433 = vmatprep.subr.mxu0 0.0
      %434 = vmatpush1.msra.mxu0 0.0
      %435 = vmatprep.subr.mxu0 0.0
      %436 = vmatpush1.msra.mxu0 0.0
      %437 = vmatprep.mubr.f32.mxu0 0.0
      %438 = vmatmul.mubr.f32.gmra.mrb[0].mxu0 %v258
      %v439 = vpop.f32.mrb[0].mxu0
      %v440 = vadd.f32 %v370, %v439
      %v441 = vpop.f32.mrb[0].mxu0
      %442 = vdwg.mxu0
      %v443 = vld [vmem:[%s3] sm:$0x1]
      %v445 = vlaneseq
      %v446 = vshrl.u32 %v445, 7
      %v447 = vsub.s32 0, %v446
      %v448 = vrot.slane %v443, %v447
      %v450 = vadd.f32 %v440, %v448
      %v451 = vxor.u32 %v450, 2147483648
      %v452 = vmul.f32 %v451, 1.442695
      %v453 = vpow.pop %v452
      %v454 = vadd.f32 %v453, 1.0
      %v455 = vrcp.pop %v454
      %v456 = vmul.f32 1.0, %v455
      %v457 = vmul.f32 %v456, %v258
      %v458 = vsub.f32 1.0, %v456
      %v459 = vmul.f32 %v458, %v270
      %v460 = vadd.f32 %v457, %v459
      %461 = vst [vmem:[#allocation10] sm:$0xff] %v460
    $region37: #{tpu_custom_call.1} parent=1 // pred_fallthru
      _
    // Predicated region
    $region38: #{tpu_custom_call.1} parent=1 // pred_check
      _
    $region39: #{tpu_custom_call.1} parent=1 // pred_check_branch
      %463 = sbr.rel (0) target = $region41
    $region40: #{tpu_custom_call.1} parent=1 // pred_region
      %s465 = ssub.s32 128, 128
      %466 = vsyncadd [#allocation6], %s465
      %s468 = sshll.u32 [#allocation10], 4
      %s469 = int_to_ptr.vmem [resolvable:$true] %s468
      %471 = dma.vmem_to_hbm [thread:$0]  %s469, 128, %s4, [#allocation6]
    $region41: #{tpu_custom_call.1} parent=1 // pred_fallthru
      _
    // Predicated region
    $region42: #{tpu_custom_call.1} parent=1 // pred_check
      _
    $region43: #{tpu_custom_call.1} parent=1 // pred_check_branch
      %473 = sbr.rel (0) target = $region45
    $region44: #{tpu_custom_call.1} parent=1 // pred_region
      %474 = dma.done [#allocation6], 128
    $region45: #{tpu_custom_call.1} parent=1 // pred_fallthru
      _
    %475 = vsyncpa [#allocation5], 1
    %476 = vsyncpa [#allocation8], 1
    %477 = vsyncpa [#allocation6], 1

</llo_original>
